<compile_context>
chip_gen: v6e
topology: v6e:2x2x1
jax: 0.10.0
libtpu: 0.0.40
codegen_flags: <defaults>
</compile_context>

<pallas_src>
import jax
import jax.numpy as jnp
from jax import lax
from jax.experimental import pallas as pl
from jax.experimental.pallas import tpu as pltpu


def adffm_fused_kernel(x_ref, w_ref, b_ref, y_ref, o_ref):
    # x_ref: (1, Hp, S)   compute_dtype  padded input slab for one batch element,
    #                                    Hp = H + KH - 1, S = (W + KW - 1) * Cin
    # w_ref: (KH, S, NL)  compute_dtype  banded, BN-scale-folded conv weights (resident)
    # b_ref: (1, NL)      f32            folded BN bias tiled across W, NL = W * Cout
    # y_ref: (1, H, NL)   compute_dtype  high-level residual slab
    # o_ref: (1, H, NL)   compute_dtype  output slab (lane-dense minor dim)
    H = o_ref.shape[1]
    KH = w_ref.shape[0]

    x = x_ref[0]                                        # (Hp, S)

    # KH chained MXU matmuls into a single f32 accumulator (kw shifts are baked
    # into the weight band; only cheap static row (H) shifts remain here).
    acc = jnp.dot(x[0:H, :], w_ref[0], preferred_element_type=jnp.float32)
    for kh in range(1, KH):
        acc = acc + jnp.dot(x[kh:kh + H, :], w_ref[kh],
                            preferred_element_type=jnp.float32)

    # Fused epilogue: BN bias + ReLU + residual add, full-lane-width VPU ops in f32.
    out = jnp.maximum(acc + b_ref[...], 0.0) + y_ref[0].astype(jnp.float32)
    o_ref[0] = out.astype(o_ref.dtype)


def prepare_adffm_params(weight_oihw, gamma, beta, running_mean, running_var,
                         H, W, eps=1e-5, compute_dtype=jnp.bfloat16):
    """One-time (per model load) BN fold + banded-weight construction.

    weight_oihw: (Cout, Cin, KH, KW) conv_x weights (no conv bias).
    Returns (w_band (KH, S, NL), bias_slab (1, NL)).
    """
    Cout, Cin, KH, KW = weight_oihw.shape
    pad = KW // 2
    Wp = W + 2 * pad
    S = Wp * Cin
    NL = W * Cout

    # Inference BN folding: scale into the conv weights, keep only the bias.
    scale = gamma / jnp.sqrt(running_var + eps)                      # (Cout,)
    bias = beta - running_mean * scale                               # (Cout,)
    w_hwio = jnp.transpose(weight_oihw, (2, 3, 1, 0)) * scale        # (KH, KW, Cin, Cout)

    # Banded weight: B[kh, p*Cin+ci, w*Cout+co] = w_hwio[kh, p-w, ci, co] if 0 <= p-w < KW,
    # which bakes every kw window shift into a dense (S, NL) MXU operand.
    sel = (jnp.arange(Wp)[None, None, :] ==
           (jnp.arange(W)[None, :, None] + jnp.arange(KW)[:, None, None]))
    sel = sel.astype(w_hwio.dtype)                                   # (KW, W, Wp)
    w_band = jnp.einsum('kwp,hkcd->hpcwd', sel, w_hwio)              # (KH, Wp, Cin, W, Cout)
    w_band = w_band.reshape(KH, S, NL).astype(compute_dtype)

    bias_slab = jnp.tile(bias, W).reshape(1, NL).astype(jnp.float32)
    return w_band, bias_slab


def adffm_forward(x_low, y_high, w_band, bias_slab, compute_dtype=jnp.bfloat16):
    """ADFFM forward (base class semantics).

    x_low:  (N, x_ch, H, W)  low-level feature  (PyTorch NCHW)
    y_high: (N, y_ch, H, W)  high-level feature (base fuse is a plain add, so it
                             must match spatially)
    Returns (N, y_ch, H, W) in x_low.dtype.
    """
    N, Cin, H, W = x_low.shape
    KH, S, NL = w_band.shape
    pad = KH // 2
    Hp = H + 2 * pad
    Cout = NL // W
    assert S == (W + 2 * pad) * Cin
    assert y_high.shape == (N, Cout, H, W)   # base ADFFM.fuse is x + y (no resize)

    # ---------------- wrapper-side layout plumbing (single pass over each array) ----
    # Lane-dense input slab: x_slab[n, h, w*Cin + ci] = x_pad[n, h, w, ci].
    x_nhwc = jnp.transpose(x_low, (0, 2, 3, 1))
    x_pad = jnp.pad(x_nhwc, ((0, 0), (pad, pad), (pad, pad), (0, 0)))
    x_slab = x_pad.reshape(N, Hp, S).astype(compute_dtype)

    # Residual stream in compute dtype (bf16 in perf mode) — y and out dominate the
    # HBM traffic of this mem-bound kernel.
    y_slab = jnp.transpose(y_high, (0, 2, 3, 1)).reshape(N, H, NL).astype(compute_dtype)

    # ---------------- Pallas call ----------------
    # Grid over batch only: no halo duplication (each padded slab is read once),
    # >=2 "parallel" steps keep both v7x TensorCores busy, and the per-step matmul
    # M dimension is the full H.  For much larger H, split H with halo-aware DMA;
    # for much larger W, tile W / NL (see module header note).
    out_slab = pl.pallas_call(
        adffm_fused_kernel,
        out_shape=jax.ShapeDtypeStruct((N, H, NL), compute_dtype),
        grid_spec=pltpu.PrefetchScalarGridSpec(
            num_scalar_prefetch=0,
            grid=(N,),
            in_specs=[
                pl.BlockSpec((1, Hp, S), lambda n: (n, 0, 0)),    # padded input slab
                pl.BlockSpec((KH, S, NL), lambda n: (0, 0, 0)),   # banded weights (resident)
                pl.BlockSpec((1, NL), lambda n: (0, 0)),          # folded BN bias
                pl.BlockSpec((1, H, NL), lambda n: (n, 0, 0)),    # residual y slab
            ],
            out_specs=pl.BlockSpec((1, H, NL), lambda n: (n, 0, 0)),
        ),
        compiler_params=pltpu.CompilerParams(
            dimension_semantics=("parallel",),
            # Blocks here are tiny (band ~55 KiB, slabs ~ a few KiB each); explicit
            # modest budget keeps us well inside v7x's 64 MiB physical VMEM.
            vmem_limit_bytes=32 * 1024 * 1024,
        ),
    )(x_slab, w_band, bias_slab, y_slab)

    out_nhwc = out_slab.reshape(N, H, W, Cout)
    return jnp.transpose(out_nhwc, (0, 3, 1, 2)).astype(x_low.dtype)


def adffm_reference(x_low, y_high, weight_oihw, gamma, beta, running_mean,
                    running_var, eps=1e-5):
    conv = lax.conv_general_dilated(
        x_low, weight_oihw, window_strides=(1, 1), padding=((1, 1), (1, 1)),
        dimension_numbers=("NCHW", "OIHW", "NCHW"))
    inv = gamma / jnp.sqrt(running_var + eps)
    bn = conv * inv[None, :, None, None] + (beta - running_mean * inv)[None, :, None, None]
    return jnp.maximum(bn, 0.0) + y_high


if __name__ == "__main__":
    # Small deterministic config: x_ch=4 (low level), y_ch=8 (high level), 16x16 spatial.
    # conv_x: Conv2d(4->8, k=3, s=1, p=1, bias=False) + BN(8) + ReLU; out = conv_x(x) + y.
    N, x_ch, y_ch, H, W = 2, 4, 8, 16, 16

    key = jax.random.PRNGKey(0)
    kx, ky, kw, kg, kb, km, kv = jax.random.split(key, 7)

    x_low = jax.random.normal(kx, (N, x_ch, H, W), dtype=jnp.float32)
    y_high = jax.random.normal(ky, (N, y_ch, H, W), dtype=jnp.float32)
    weight = jax.random.normal(kw, (y_ch, x_ch, 3, 3), dtype=jnp.float32) * 0.1
    gamma = 1.0 + 0.1 * jax.random.normal(kg, (y_ch,), dtype=jnp.float32)
    beta = 0.1 * jax.random.normal(kb, (y_ch,), dtype=jnp.float32)
    running_mean = 0.1 * jax.random.normal(km, (y_ch,), dtype=jnp.float32)
    running_var = jnp.abs(jax.random.normal(kv, (y_ch,), dtype=jnp.float32)) + 0.5

    # TODO(synk): training-mode BatchNorm (batch statistics + running-stat updates) is
    # not implemented; this kernel uses inference-mode BN folded into the conv weights.

    ref = jax.block_until_ready(
        adffm_reference(x_low, y_high, weight, gamma, beta, running_mean, running_var))

    # Strict correctness check: f32 operands and f32 output slab.
    w_band_f32, bias_slab = prepare_adffm_params(
        weight, gamma, beta, running_mean, running_var, H, W,
        compute_dtype=jnp.float32)
    out_f32 = jax.block_until_ready(
        adffm_forward(x_low, y_high, w_band_f32, bias_slab,
                      compute_dtype=jnp.float32))
    assert out_f32.shape == (N, y_ch, H, W)
    assert jnp.allclose(out_f32, ref, atol=1e-4, rtol=1e-4)

    # Performance mode: bf16 operands / bf16 y+output streams (f32 MXU accumulation
    # and f32 epilogue math) — looser tolerance.
    w_band_bf16, bias_slab_bf16 = prepare_adffm_params(
        weight, gamma, beta, running_mean, running_var, H, W,
        compute_dtype=jnp.bfloat16)
    out_bf16 = jax.block_until_ready(
        adffm_forward(x_low, y_high, w_band_bf16, bias_slab_bf16,
                      compute_dtype=jnp.bfloat16))
    assert out_bf16.shape == (N, y_ch, H, W)
    assert jnp.allclose(out_bf16, ref, atol=5e-2, rtol=5e-2)

    print("KERNEL_OK")
</pallas_src>

<mosaic_0001>
module attributes {stable_mosaic.version = 11 : i64} {
  func.func @adffm_fused_kernel(%arg0: i32, %arg1: memref<1x18x72xf32, #tpu.memory_space<vmem>>, %arg2: memref<3x72x128xf32, #tpu.memory_space<vmem>>, %arg3: memref<1x128xf32, #tpu.memory_space<vmem>>, %arg4: memref<1x16x128xf32, #tpu.memory_space<vmem>>, %arg5: memref<1x16x128xf32, #tpu.memory_space<vmem>>) attributes {dimension_semantics = [#tpu.dimension_semantics<parallel>], iteration_bounds = array<i64: 2>, scalar_prefetch = 0 : i64, scratch_operands = 0 : i64, tpu.core_type = #tpu.core_type<tc>, window_params = [{transform_indices = @transform_0, window_bounds = array<i64: 1, 18, 72>}, {pipeline_mode = #tpu.pipeline_mode<synchronous>, transform_indices = @transform_1, window_bounds = array<i64: 3, 72, 128>}, {pipeline_mode = #tpu.pipeline_mode<synchronous>, transform_indices = @transform_2, window_bounds = array<i64: 1, 128>}, {transform_indices = @transform_3, window_bounds = array<i64: 1, 16, 128>}, {transform_indices = @transform_4, window_bounds = array<i64: 1, 16, 128>}]} {
    %c0 = arith.constant 0 : index
    %c0_0 = arith.constant 0 : index
    %c0_1 = arith.constant 0 : index
    %0 = vector.load %arg1[%c0, %c0_0, %c0_1] : memref<1x18x72xf32, #tpu.memory_space<vmem>>, vector<1x18x72xf32>
    %1 = vector.shape_cast %0 : vector<1x18x72xf32> to vector<18x72xf32>
    %2 = vector.extract_strided_slice %1 {offsets = [0, 0], sizes = [16, 72], strides = [1, 1]} : vector<18x72xf32> to vector<16x72xf32>
    %c0_2 = arith.constant 0 : index
    %c0_3 = arith.constant 0 : index
    %c0_4 = arith.constant 0 : index
    %3 = vector.load %arg2[%c0_2, %c0_3, %c0_4] : memref<3x72x128xf32, #tpu.memory_space<vmem>>, vector<1x72x128xf32>
    %4 = vector.shape_cast %3 : vector<1x72x128xf32> to vector<72x128xf32>
    %cst = arith.constant dense<0.000000e+00> : vector<16x128xf32>
    %5 = tpu.matmul %2, %4, %cst {dimension_numbers = #tpu.dot_dimension_numbers<[1], [0], [0], [1], [0, 0, 1, 1], [], []>} : vector<16x72xf32>, vector<72x128xf32>, vector<16x128xf32> -> vector<16x128xf32>
    %6 = vector.extract_strided_slice %1 {offsets = [1, 0], sizes = [16, 72], strides = [1, 1]} : vector<18x72xf32> to vector<16x72xf32>
    %c1 = arith.constant 1 : index
    %c0_5 = arith.constant 0 : index
    %c0_6 = arith.constant 0 : index
    %7 = vector.load %arg2[%c1, %c0_5, %c0_6] : memref<3x72x128xf32, #tpu.memory_space<vmem>>, vector<1x72x128xf32>
    %8 = vector.shape_cast %7 : vector<1x72x128xf32> to vector<72x128xf32>
    %cst_7 = arith.constant dense<0.000000e+00> : vector<16x128xf32>
    %9 = tpu.matmul %6, %8, %cst_7 {dimension_numbers = #tpu.dot_dimension_numbers<[1], [0], [0], [1], [0, 0, 1, 1], [], []>} : vector<16x72xf32>, vector<72x128xf32>, vector<16x128xf32> -> vector<16x128xf32>
    %10 = arith.addf %5, %9 : vector<16x128xf32>
    %11 = vector.extract_strided_slice %1 {offsets = [2, 0], sizes = [16, 72], strides = [1, 1]} : vector<18x72xf32> to vector<16x72xf32>
    %c2 = arith.constant 2 : index
    %c0_8 = arith.constant 0 : index
    %c0_9 = arith.constant 0 : index
    %12 = vector.load %arg2[%c2, %c0_8, %c0_9] : memref<3x72x128xf32, #tpu.memory_space<vmem>>, vector<1x72x128xf32>
    %13 = vector.shape_cast %12 : vector<1x72x128xf32> to vector<72x128xf32>
    %cst_10 = arith.constant dense<0.000000e+00> : vector<16x128xf32>
    %14 = tpu.matmul %11, %13, %cst_10 {dimension_numbers = #tpu.dot_dimension_numbers<[1], [0], [0], [1], [0, 0, 1, 1], [], []>} : vector<16x72xf32>, vector<72x128xf32>, vector<16x128xf32> -> vector<16x128xf32>
    %15 = arith.addf %10, %14 : vector<16x128xf32>
    %c0_11 = arith.constant 0 : index
    %c0_12 = arith.constant 0 : index
    %16 = vector.load %arg3[%c0_11, %c0_12] : memref<1x128xf32, #tpu.memory_space<vmem>>, vector<1x128xf32>
    %17 = vector.broadcast %16 : vector<1x128xf32> to vector<16x128xf32>
    %18 = arith.addf %15, %17 : vector<16x128xf32>
    %cst_13 = arith.constant 0.000000e+00 : f32
    %19 = vector.broadcast %cst_13 : f32 to vector<16x128xf32>
    %20 = arith.maximumf %18, %19 : vector<16x128xf32>
    %c0_14 = arith.constant 0 : index
    %c0_15 = arith.constant 0 : index
    %c0_16 = arith.constant 0 : index
    %21 = vector.load %arg4[%c0_14, %c0_15, %c0_16] : memref<1x16x128xf32, #tpu.memory_space<vmem>>, vector<1x16x128xf32>
    %22 = vector.shape_cast %21 : vector<1x16x128xf32> to vector<16x128xf32>
    %23 = arith.addf %20, %22 : vector<16x128xf32>
    %c0_17 = arith.constant 0 : index
    %c0_18 = arith.constant 0 : index
    %c0_19 = arith.constant 0 : index
    %24 = vector.load %arg5[%c0_17, %c0_18, %c0_19] : memref<1x16x128xf32, #tpu.memory_space<vmem>>, vector<1x16x128xf32>
    %25 = vector.shape_cast %24 : vector<1x16x128xf32> to vector<16x128xf32>
    %26 = vector.shape_cast %23 : vector<16x128xf32> to vector<1x16x128xf32>
    tpu.vector_store %arg5[%c0_17, %c0_18, %c0_19], %26 {strides = array<i32>} : memref<1x16x128xf32, #tpu.memory_space<vmem>>, vector<1x16x128xf32>,
    return
  }
  func.func @transform_0(%arg0: i32) -> (i32, i32, i32) {
    %c0_i32 = arith.constant 0 : i32
    %c0_i32_0 = arith.constant 0 : i32
    %c0_i32_1 = arith.constant 0 : i32
    return %arg0, %c0_i32, %c0_i32_0 : i32, i32, i32
  }
  func.func @transform_1(%arg0: i32) -> (i32, i32, i32) {
    %c0_i32 = arith.constant 0 : i32
    %c0_i32_0 = arith.constant 0 : i32
    %c0_i32_1 = arith.constant 0 : i32
    %c0_i32_2 = arith.constant 0 : i32
    return %c0_i32, %c0_i32_0, %c0_i32_1 : i32, i32, i32
  }
  func.func @transform_2(%arg0: i32) -> (i32, i32) {
    %c0_i32 = arith.constant 0 : i32
    %c0_i32_0 = arith.constant 0 : i32
    %c0_i32_1 = arith.constant 0 : i32
    return %c0_i32, %c0_i32_0 : i32, i32
  }
  func.func @transform_3(%arg0: i32) -> (i32, i32, i32) {
    %c0_i32 = arith.constant 0 : i32
    %c0_i32_0 = arith.constant 0 : i32
    %c0_i32_1 = arith.constant 0 : i32
    return %arg0, %c0_i32, %c0_i32_0 : i32, i32, i32
  }
  func.func @transform_4(%arg0: i32) -> (i32, i32, i32) {
    %c0_i32 = arith.constant 0 : i32
    %c0_i32_0 = arith.constant 0 : i32
    %c0_i32_1 = arith.constant 0 : i32
    return %arg0, %c0_i32, %c0_i32_0 : i32, i32, i32
  }
}

</mosaic_0001>

<llo_original>
// kernel: tpu_custom_call.1
$region0: #{tpu_custom_call.1}
  #allocation0 [shape = 'u32[]', space=smem, size = 0x4, offset = 0x4, fixed_abs, tag = 'smem constant byte address 0x4 - core index']
  #allocation1 [shape = 'u32[144,128]{1,0:T(1,128)}', space=vmem, size = 0x12000, scoped, tag = 'internal scratch']
  %s0 = inlined_call_operand.vmem [shape: f32[2,18,72], index: 0, kind: input, shape index: {}]
  %s1 = inlined_call_operand.hbm [shape: f32[3,72,128], index: 1, kind: input, shape index: {}]
  %s2 = inlined_call_operand.vmem [shape: f32[1,128], index: 2, kind: input, shape index: {}]
  %s3 = inlined_call_operand.vmem [shape: f32[2,16,128], index: 3, kind: input, shape index: {}]
  %s4 = inlined_call_operand.hbm [shape: f32[2,16,128], index: 4, kind: output, shape index: {}]
  %s5 = sld [smem:[#allocation0]]
  $region53: #{tpu_custom_call.1} parent=0
    _
  %s7 = ssub.s32 1, %s5
  %s8 = scalar_select 0, %s7, %s5
  $region1: #{tpu_custom_call.1} parent=0
    #allocation2 [shape = 'u8[110592]{0}', space=vmem, size = 0x1b000, scoped, tag = 'input window, operand 1, single buffered']
    #allocation3 [shape = 's32[2]{0}', space=sflag, size = 0x8, scoped, tag = 'scoped memory for tpu_custom_call.1']
    #allocation4 [shape = 's32[2]{0}', space=sflag, size = 0x8, scoped, tag = 'scoped memory for tpu_custom_call.1']
    #allocation5 [shape = 'u8[16384]{0}', space=vmem, size = 0x4000, scoped, tag = 'output window, operand 0']
    %9 = vsyncpa [#allocation3], 0
    %10 = vsyncpa [#allocation4], 0
    %s11 = scalar_lea.sflag [#allocation4], 1
    %12 = vsyncpa %s11, 0
    loop: start=0, step=1, limit=4
    $region2: #{tpu_custom_call.1} parent=1 // loop_pre_header
      _
    $region3: #{tpu_custom_call.1} parent=1 // loop_header
      %s14 = sphi 0, %s18
      %p15 = scmp.ge.s32.totalorder %s14, 4
      %s24 = sphi 0, %s26
      %s27 = sphi 0, %s24
      %s28 = sphi 0, %s27
      %s44 = sphi 0, %s28
      %s48 = sphi 0, %s48
      %s50 = sphi 0, %s48
      %s51 = sphi 0, %s50
      %s65 = sphi 0, %s51
      %s69 = sphi 0, %s69
      %s71 = sphi 0, %s69
      %s72 = sphi 0, %s71
      %s86 = sphi 0, %s72
      %s92 = sphi 0, %s94
      %s95 = sphi 0, %s92
      %s96 = sphi 0, %s95
      %s112 = sphi 0, %s96
      %s118 = sphi 0, %s120
      %s121 = sphi 0, %s118
      %s122 = sphi 0, %s121
      %s138 = sphi 0, %s122
    $region4: #{tpu_custom_call.1} parent=1 // loop_header_branch
      %17 = sbr.rel (%p15) target = $region8
    $region5: #{tpu_custom_call.1} parent=1 // loop_body
      %s19 = ssub.s32 %s14, 1
      %s20 = ssub.s32 %s14, 2
      %s21 = sadd.s32 %s14, 1
      %s22 = ssub.s32 %s14, %s21
      %p23 = scmp.eq.s32.totalorder %s22, 0
      %s25 = sadd.s32 %s24, 1
      %s26 = scalar_select %p23, %s24, %s25
      %p29 = pneg %p23
      %p30 = scmp.eq.s32.totalorder %s14, 1
      %p31 = por %p29, %p30
      %p32 = scmp.ne.s32.totalorder %s24, %s27
      %p33 = scmp.eq.s32.totalorder %s14, 0
      %p34 = por %p32, %p33
      %p35 = scmp.ne.s32.totalorder %s24, %s27
      %p36 = scmp.eq.s32.totalorder %s19, 1
      %p37 = por %p35, %p36
      %p38 = scmp.ne.s32.totalorder %s27, %s28
      %p39 = scmp.eq.s32.totalorder %s19, 0
      %p40 = por %p38, %p39
      %p41 = scmp.ne.s32.totalorder %s27, %s28
      %p42 = scmp.eq.s32.totalorder %s20, 1
      %p43 = por %p41, %p42
      %p45 = scmp.ne.s32.totalorder %s28, %s44
      %p46 = scmp.eq.s32.totalorder %s20, 0
      %p47 = por %p45, %p46
      %s49 = sadd.s32 %s48, 1
      %p52 = scmp.eq.s32.totalorder %s14, 1
      %p53 = scmp.ne.s32.totalorder %s48, %s50
      %p54 = scmp.eq.s32.totalorder %s14, 0
      %p55 = por %p53, %p54
      %p56 = scmp.ne.s32.totalorder %s48, %s50
      %p57 = scmp.eq.s32.totalorder %s19, 1
      %p58 = por %p56, %p57
      %p59 = scmp.ne.s32.totalorder %s50, %s51
      %p60 = scmp.eq.s32.totalorder %s19, 0
      %p61 = por %p59, %p60
      %p62 = scmp.ne.s32.totalorder %s50, %s51
      %p63 = scmp.eq.s32.totalorder %s20, 1
      %p64 = por %p62, %p63
      %p66 = scmp.ne.s32.totalorder %s51, %s65
      %p67 = scmp.eq.s32.totalorder %s20, 0
      %p68 = por %p66, %p67
      %s70 = sadd.s32 %s69, 1
      %p73 = scmp.eq.s32.totalorder %s14, 1
      %p74 = scmp.ne.s32.totalorder %s69, %s71
      %p75 = scmp.eq.s32.totalorder %s14, 0
      %p76 = por %p74, %p75
      %p77 = scmp.ne.s32.totalorder %s69, %s71
      %p78 = scmp.eq.s32.totalorder %s19, 1
      %p79 = por %p77, %p78
      %p80 = scmp.ne.s32.totalorder %s71, %s72
      %p81 = scmp.eq.s32.totalorder %s19, 0
      %p82 = por %p80, %p81
      %p83 = scmp.ne.s32.totalorder %s71, %s72
      %p84 = scmp.eq.s32.totalorder %s20, 1
      %p85 = por %p83, %p84
      %p87 = scmp.ne.s32.totalorder %s72, %s86
      %p88 = scmp.eq.s32.totalorder %s20, 0
      %p89 = por %p87, %p88
      %s90 = ssub.s32 %s14, %s21
      %p91 = scmp.eq.s32.totalorder %s90, 0
      %s93 = sadd.s32 %s92, 1
      %s94 = scalar_select %p91, %s92, %s93
      %p97 = pneg %p91
      %p98 = scmp.eq.s32.totalorder %s14, 1
      %p99 = por %p97, %p98
      %p100 = scmp.ne.s32.totalorder %s92, %s95
      %p101 = scmp.eq.s32.totalorder %s14, 0
      %p102 = por %p100, %p101
      %p103 = scmp.ne.s32.totalorder %s92, %s95
      %p104 = scmp.eq.s32.totalorder %s19, 1
      %p105 = por %p103, %p104
      %p106 = scmp.ne.s32.totalorder %s95, %s96
      %p107 = scmp.eq.s32.totalorder %s19, 0
      %p108 = por %p106, %p107
      %p109 = scmp.ne.s32.totalorder %s95, %s96
      %p110 = scmp.eq.s32.totalorder %s20, 1
      %p111 = por %p109, %p110
      %p113 = scmp.ne.s32.totalorder %s96, %s112
      %p114 = scmp.eq.s32.totalorder %s20, 0
      %p115 = por %p113, %p114
      %s116 = ssub.s32 %s14, %s21
      %p117 = scmp.eq.s32.totalorder %s116, 0
      %s119 = sadd.s32 %s118, 1
      %s120 = scalar_select %p117, %s118, %s119
      %p123 = pneg %p117
      %p124 = scmp.eq.s32.totalorder %s14, 1
      %p125 = por %p123, %p124
      %p126 = scmp.ne.s32.totalorder %s118, %s121
      %p127 = scmp.eq.s32.totalorder %s14, 0
      %p128 = por %p126, %p127
      %p129 = scmp.ne.s32.totalorder %s118, %s121
      %p130 = scmp.eq.s32.totalorder %s19, 1
      %p131 = por %p129, %p130
      %p132 = scmp.ne.s32.totalorder %s121, %s122
      %p133 = scmp.eq.s32.totalorder %s19, 0
      %p134 = por %p132, %p133
      %p135 = scmp.ne.s32.totalorder %s121, %s122
      %p136 = scmp.eq.s32.totalorder %s20, 1
      %p137 = por %p135, %p136
      %p139 = scmp.ne.s32.totalorder %s122, %s138
      %p140 = scmp.eq.s32.totalorder %s20, 0
      %p141 = por %p139, %p140
      %p142 = scmp.le.s32.totalorder 1, %s14
      %p143 = scmp.lt.s32.totalorder %s14, 3
      %p144 = pnand %p142, %p143
      %p145 = pneg %p144
      // Predicated region
      $region9: #{tpu_custom_call.1} parent=5 // pred_check
        _
      $region10: #{tpu_custom_call.1} parent=5 // pred_check_branch
        %147 = sbr.rel (%p144) target = $region12
      $region11: #{tpu_custom_call.1} parent=5 // pred_region
        %s148 = ssub.s32 %s14, 1
        // Predicated region
        $region13: #{tpu_custom_call.1} parent=11 // pred_check
          %p149 = pneg %p61
        $region14: #{tpu_custom_call.1} parent=11 // pred_check_branch
          %151 = sbr.rel (%p149) target = $region16
        $region15: #{tpu_custom_call.1} parent=11 // pred_region
          %s153 = ssub.s32 3456, 3456
          %154 = vsyncadd [#allocation3], %s153
          %s155 = sshll.u32 [#allocation2], 4
          %s156 = int_to_ptr.vmem [resolvable:$true] %s155
          %161 = dma.hbm_to_vmem [thread:$0]  %s1, 3456, %s156, [#allocation3], 128, 128, 8
        $region16: #{tpu_custom_call.1} parent=11 // pred_fallthru
          _
        // Predicated region
        $region17: #{tpu_custom_call.1} parent=11 // pred_check
          %p162 = pneg %p82
        $region18: #{tpu_custom_call.1} parent=11 // pred_check_branch
          %164 = sbr.rel (%p162) target = $region20
        $region19: #{tpu_custom_call.1} parent=11 // pred_region
          _
        $region20: #{tpu_custom_call.1} parent=11 // pred_fallthru
          _
      $region12: #{tpu_custom_call.1} parent=5 // pred_fallthru
        _
      %p165 = scmp.lt.s32.totalorder %s14, 2
      // Predicated region
      $region21: #{tpu_custom_call.1} parent=5 // pred_check
        %p166 = pneg %p165
      $region22: #{tpu_custom_call.1} parent=5 // pred_check_branch
        %168 = sbr.rel (%p166) target = $region24
      $region23: #{tpu_custom_call.1} parent=5 // pred_region
        // Predicated region
        $region25: #{tpu_custom_call.1} parent=23 // pred_check
          %p169 = pneg %p34
        $region26: #{tpu_custom_call.1} parent=23 // pred_check_branch
          %171 = sbr.rel (%p169) target = $region28
        $region27: #{tpu_custom_call.1} parent=23 // pred_region
          %p172 = scmp.lt.s32.totalorder %s14, 1
          %s173 = scalar_select %p172, %s14, 1
          %s174 = smul.addr %s173, 3
          %s175 = smul.addr %s174, 8
          %s176 = scalar_lea.vmem %s0, %s175
        $region28: #{tpu_custom_call.1} parent=23 // pred_fallthru
          _
        // Predicated region
        $region29: #{tpu_custom_call.1} parent=23 // pred_check
          %p177 = pneg %p102
        $region30: #{tpu_custom_call.1} parent=23 // pred_check_branch
          %179 = sbr.rel (%p177) target = $region32
        $region31: #{tpu_custom_call.1} parent=23 // pred_region
          %p180 = scmp.lt.s32.totalorder %s14, 1
          %s181 = scalar_select %p180, %s14, 1
          %s182 = smul.addr %s181, 2
          %s183 = smul.addr %s182, 8
          %s184 = scalar_lea.vmem %s3, %s183
        $region32: #{tpu_custom_call.1} parent=23 // pred_fallthru
          _
      $region24: #{tpu_custom_call.1} parent=5 // pred_fallthru
        _
      %p185 = scmp.le.s32.totalorder 1, %s14
      %p186 = scmp.lt.s32.totalorder %s14, 3
      %p187 = pnand %p185, %p186
      %p188 = pneg %p187
      // Predicated region
      $region33: #{tpu_custom_call.1} parent=5 // pred_check
        _
      $region34: #{tpu_custom_call.1} parent=5 // pred_check_branch
        %190 = sbr.rel (%p187) target = $region36
      $region35: #{tpu_custom_call.1} parent=5 // pred_region
        %s191 = ssub.s32 %s14, 1
        // Predicated region
        $region37: #{tpu_custom_call.1} parent=35 // pred_check
          %p192 = pneg %p61
        $region38: #{tpu_custom_call.1} parent=35 // pred_check_branch
          %194 = sbr.rel (%p192) target = $region40
        $region39: #{tpu_custom_call.1} parent=35 // pred_region
          %195 = dma.done [#allocation3], 3456
        $region40: #{tpu_custom_call.1} parent=35 // pred_fallthru
          _
        %p196 = scmp.lt.s32.totalorder %s19, 1
        %s197 = scalar_select %p196, %s19, 1
        %s198 = smul.addr %s197, 3
        %s199 = smul.addr %s198, 8
        %s200 = scalar_lea.vmem %s0, %s199
        %p201 = pneg %p40
        %p202 = pneg %p37
        %p203 = pneg %p61
        %p204 = pneg %p58
        %p205 = pneg %p82
        %p206 = pneg %p79
        %p207 = scmp.lt.s32.totalorder %s19, 1
        %s208 = scalar_select %p207, %s19, 1
        %s209 = smul.addr %s208, 2
        %s210 = smul.addr %s209, 8
        %s211 = scalar_lea.vmem %s3, %s210
        %p212 = pneg %p108
        %p213 = pneg %p105
        %p214 = pneg %p134
        %p215 = pneg %p131
        %s216 = sand.u32 %s121, 1
        %s217 = scalar_lea.sflag [#allocation4], %s216
        %s218 = sand.u32 %s121, 1
        %s219 = smul.addr %s218, 16
        %s220 = scalar_lea.vmem [#allocation5], %s219
        %p221 = scmp.lt.s32.totalorder %s19, 1
        %s222 = scalar_select %p221, %s19, 1
        %s223 = smul.addr %s222, 3
        %s224 = smul.addr %s223, 8
        %s225 = scalar_lea.vmem %s0, %s224
        %p226 = scmp.lt.s32.totalorder %s19, 1
        %s227 = scalar_select %p226, %s19, 1
        %s228 = smul.addr %s227, 2
        %s229 = smul.addr %s228, 8
        %s230 = scalar_lea.vmem %s3, %s229
        %v231 = vld [vmem:[%s225] sm:$0xff]
        %v232 = vld [vmem:[%s225 + $0x8] sm:$0xff]
        %v233 = vld [vmem:[%s225 + $0x10] sm:$0x3]
        %v234 = vld [vmem:[#allocation2] sm:$0xff]
        %v235 = vld [vmem:[#allocation2 + $0x8] sm:$0xff]
        %v236 = vld [vmem:[#allocation2 + $0x10] sm:$0xff]
        %v237 = vld [vmem:[#allocation2 + $0x18] sm:$0xff]
        %v238 = vld [vmem:[#allocation2 + $0x20] sm:$0xff]
        %v239 = vld [vmem:[#allocation2 + $0x28] sm:$0xff]
        %v240 = vld [vmem:[#allocation2 + $0x30] sm:$0xff]
        %v241 = vld [vmem:[#allocation2 + $0x38] sm:$0xff]
        %v242 = vld [vmem:[#allocation2 + $0x40] sm:$0xff]
        %s243 = scalar_lea.vmem [#allocation2], 72
        %v244 = vld [vmem:[%s243] sm:$0xff]
        %v245 = vld [vmem:[%s243 + $0x8] sm:$0xff]
        %v246 = vld [vmem:[%s243 + $0x10] sm:$0xff]
        %v247 = vld [vmem:[%s243 + $0x18] sm:$0xff]
        %v248 = vld [vmem:[%s243 + $0x20] sm:$0xff]
        %v249 = vld [vmem:[%s243 + $0x28] sm:$0xff]
        %v250 = vld [vmem:[%s243 + $0x30] sm:$0xff]
        %v251 = vld [vmem:[%s243 + $0x38] sm:$0xff]
        %v252 = vld [vmem:[%s243 + $0x40] sm:$0xff]
        %vm256 = vcmask 1046528
        %v257 = vrot.slane %v231, 1
        %v258 = vrot.slane %v232, 1
        %v259 = vsel %vm256, %v257, %v258
        %v260 = vrot.slane %v233, 1
        %v261 = vsel %vm256, %v258, %v260
        %vm262 = vcmask 588800
        %v263 = vsel %vm262, %v259, 0
        %v265 = vsel %vm262, %v261, 0
        %267 = vmatprep.subr.mxu0 0.0
        %268 = vmatpush1.msra.mxu0 0.0
        %269 = vmatprep.subr.mxu0 0.0
        %270 = vmatpush1.msra.mxu0 0.0
        %271 = vmatprep.subr.mxu0 0.0
        %272 = vmatpush1.msra.mxu0 0.0
        %273 = vmatprep.subr.mxu0 0.0
        %274 = vmatpush1.msra.mxu0 0.0
        %275 = vmatprep.subr.mxu0 0.0
        %276 = vmatpush1.msra.mxu0 0.0
        %277 = vmatprep.subr.mxu0 0.0
        %278 = vmatpush1.msra.mxu0 0.0
        %279 = vmatprep.subr.mxu0 0.0
        %280 = vmatpush1.msra.mxu0 0.0
        %281 = vmatprep.subr.mxu0 0.0
        %282 = vmatpush1.msra.mxu0 %v252
        %283 = vmatprep.subr.mxu0 0.0
        %284 = vmatpush1.msra.mxu0 %v251
        %285 = vmatprep.subr.mxu0 0.0
        %286 = vmatpush1.msra.mxu0 %v250
        %287 = vmatprep.subr.mxu0 0.0
        %288 = vmatpush1.msra.mxu0 %v249
        %289 = vmatprep.subr.mxu0 0.0
        %290 = vmatpush1.msra.mxu0 %v248
        %291 = vmatprep.subr.mxu0 0.0
        %292 = vmatpush1.msra.mxu0 %v247
        %293 = vmatprep.subr.mxu0 0.0
        %294 = vmatpush1.msra.mxu0 %v246
        %295 = vmatprep.subr.mxu0 0.0
        %296 = vmatpush1.msra.mxu0 %v245
        %297 = vmatprep.subr.mxu0 0.0
        %298 = vmatpush1.msra.mxu0 %v244
        %299 = vmatprep.subr.mxu0 0.0
        %300 = vmatpush2.msra.mxu0 0.0
        %301 = vmatprep.subr.mxu0 0.0
        %302 = vmatpush2.msra.mxu0 0.0
        %303 = vmatprep.subr.mxu0 0.0
        %304 = vmatpush2.msra.mxu0 0.0
        %305 = vmatprep.subr.mxu0 0.0
        %306 = vmatpush2.msra.mxu0 0.0
        %307 = vmatprep.subr.mxu0 0.0
        %308 = vmatpush2.msra.mxu0 0.0
        %309 = vmatprep.subr.mxu0 0.0
        %310 = vmatpush2.msra.mxu0 0.0
        %311 = vmatprep.subr.mxu0 0.0
        %312 = vmatpush2.msra.mxu0 0.0
        %313 = vmatprep.subr.mxu0 0.0
        %314 = vmatpush2.msra.mxu0 0.0
        %315 = vmatprep.subr.mxu0 0.0
        %316 = vmatpush2.msra.mxu0 0.0
        %317 = vmatprep.subr.mxu0 0.0
        %318 = vmatpush2.msra.mxu0 0.0
        %319 = vmatprep.subr.mxu0 0.0
        %320 = vmatpush2.msra.mxu0 0.0
        %321 = vmatprep.subr.mxu0 0.0
        %322 = vmatpush2.msra.mxu0 0.0
        %323 = vmatprep.subr.mxu0 0.0
        %324 = vmatpush2.msra.mxu0 0.0
        %325 = vmatprep.subr.mxu0 0.0
        %326 = vmatpush2.msra.mxu0 0.0
        %327 = vmatprep.subr.mxu0 0.0
        %328 = vmatpush2.msra.mxu0 0.0
        %329 = vmatprep.subr.mxu0 0.0
        %330 = vmatpush2.msra.mxu0 0.0
        %331 = vmatprep.mubr.f32.mxu0 0.0
        %332 = vmatmul.mubr.f32.gmra.mxu0 %v263
        %v333 = vpop.f32.mrf.mxu0
        %v334 = vadd.f32 0.0, %v333
        %v335 = vpop.f32.mrf.mxu0
        %336 = vmatprep.mubr.f32.mxu0 0.0
        %337 = vmatmul.mubr.f32.gmra.mxu0 %v265
        %v338 = vpop.f32.mrf.mxu0
        %v339 = vadd.f32 0.0, %v338
        %v340 = vpop.f32.mrf.mxu0
        %341 = vdwg.mxu0
        %v342 = vsel %vm262, %v231, 0
        %v344 = vsel %vm262, %v232, 0
        %346 = vmatprep.subr.mxu0 0.0
        %347 = vmatpush1.msra.mxu0 0.0
        %348 = vmatprep.subr.mxu0 0.0
        %349 = vmatpush1.msra.mxu0 0.0
        %350 = vmatprep.subr.mxu0 0.0
        %351 = vmatpush1.msra.mxu0 0.0
        %352 = vmatprep.subr.mxu0 0.0
        %353 = vmatpush1.msra.mxu0 0.0
        %354 = vmatprep.subr.mxu0 0.0
        %355 = vmatpush1.msra.mxu0 0.0
        %356 = vmatprep.subr.mxu0 0.0
        %357 = vmatpush1.msra.mxu0 0.0
        %358 = vmatprep.subr.mxu0 0.0
        %359 = vmatpush1.msra.mxu0 0.0
        %360 = vmatprep.subr.mxu0 0.0
        %361 = vmatpush1.msra.mxu0 %v242
        %362 = vmatprep.subr.mxu0 0.0
        %363 = vmatpush1.msra.mxu0 %v241
        %364 = vmatprep.subr.mxu0 0.0
        %365 = vmatpush1.msra.mxu0 %v240
        %366 = vmatprep.subr.mxu0 0.0
        %367 = vmatpush1.msra.mxu0 %v239
        %368 = vmatprep.subr.mxu0 0.0
        %369 = vmatpush1.msra.mxu0 %v238
        %370 = vmatprep.subr.mxu0 0.0
        %371 = vmatpush1.msra.mxu0 %v237
        %372 = vmatprep.subr.mxu0 0.0
        %373 = vmatpush1.msra.mxu0 %v236
        %374 = vmatprep.subr.mxu0 0.0
        %375 = vmatpush1.msra.mxu0 %v235
        %376 = vmatprep.subr.mxu0 0.0
        %377 = vmatpush1.msra.mxu0 %v234
        %378 = vmatprep.subr.mxu0 0.0
        %379 = vmatpush2.msra.mxu0 0.0
        %380 = vmatprep.subr.mxu0 0.0
        %381 = vmatpush2.msra.mxu0 0.0
        %382 = vmatprep.subr.mxu0 0.0
        %383 = vmatpush2.msra.mxu0 0.0
        %384 = vmatprep.subr.mxu0 0.0
        %385 = vmatpush2.msra.mxu0 0.0
        %386 = vmatprep.subr.mxu0 0.0
        %387 = vmatpush2.msra.mxu0 0.0
        %388 = vmatprep.subr.mxu0 0.0
        %389 = vmatpush2.msra.mxu0 0.0
        %390 = vmatprep.subr.mxu0 0.0
        %391 = vmatpush2.msra.mxu0 0.0
        %392 = vmatprep.subr.mxu0 0.0
        %393 = vmatpush2.msra.mxu0 0.0
        %394 = vmatprep.subr.mxu0 0.0
        %395 = vmatpush2.msra.mxu0 0.0
        %396 = vmatprep.subr.mxu0 0.0
        %397 = vmatpush2.msra.mxu0 0.0
        %398 = vmatprep.subr.mxu0 0.0
        %399 = vmatpush2.msra.mxu0 0.0
        %400 = vmatprep.subr.mxu0 0.0
        %401 = vmatpush2.msra.mxu0 0.0
        %402 = vmatprep.subr.mxu0 0.0
        %403 = vmatpush2.msra.mxu0 0.0
        %404 = vmatprep.subr.mxu0 0.0
        %405 = vmatpush2.msra.mxu0 0.0
        %406 = vmatprep.subr.mxu0 0.0
        %407 = vmatpush2.msra.mxu0 0.0
        %408 = vmatprep.subr.mxu0 0.0
        %409 = vmatpush2.msra.mxu0 0.0
        %410 = vmatprep.mubr.f32.mxu0 0.0
        %411 = vmatmul.mubr.f32.gmra.mxu0 %v342
        %v412 = vpop.f32.mrf.mxu0
        %v413 = vadd.f32 %v334, %v412
        %v414 = vpop.f32.mrf.mxu0
        %415 = vmatprep.mubr.f32.mxu0 0.0
        %416 = vmatmul.mubr.f32.gmra.mxu0 %v344
        %v417 = vpop.f32.mrf.mxu0
        %v418 = vadd.f32 %v339, %v417
        %v419 = vpop.f32.mrf.mxu0
        %420 = vdwg.mxu0
        %s421 = scalar_lea.vmem [#allocation2], 144
        %v422 = vld [vmem:[%s421] sm:$0xff]
        %v423 = vld [vmem:[%s421 + $0x8] sm:$0xff]
        %v424 = vld [vmem:[%s421 + $0x10] sm:$0xff]
        %v425 = vld [vmem:[%s421 + $0x18] sm:$0xff]
        %v426 = vld [vmem:[%s421 + $0x20] sm:$0xff]
        %v427 = vld [vmem:[%s421 + $0x28] sm:$0xff]
        %v428 = vld [vmem:[%s421 + $0x30] sm:$0xff]
        %v429 = vld [vmem:[%s421 + $0x38] sm:$0xff]
        %v430 = vld [vmem:[%s421 + $0x40] sm:$0xff]
        %vm431 = vcmask 1045504
        %v432 = vrot.slane %v231, 2
        %v433 = vrot.slane %v232, 2
        %v434 = vsel %vm431, %v432, %v433
        %v435 = vrot.slane %v233, 2
        %v436 = vsel %vm431, %v433, %v435
        %v437 = vsel %vm262, %v434, 0
        %v439 = vsel %vm262, %v436, 0
        %441 = vmatprep.subr.mxu0 0.0
        %442 = vmatpush1.msra.mxu0 0.0
        %443 = vmatprep.subr.mxu0 0.0
        %444 = vmatpush1.msra.mxu0 0.0
        %445 = vmatprep.subr.mxu0 0.0
        %446 = vmatpush1.msra.mxu0 0.0
        %447 = vmatprep.subr.mxu0 0.0
        %448 = vmatpush1.msra.mxu0 0.0
        %449 = vmatprep.subr.mxu0 0.0
        %450 = vmatpush1.msra.mxu0 0.0
        %451 = vmatprep.subr.mxu0 0.0
        %452 = vmatpush1.msra.mxu0 0.0
        %453 = vmatprep.subr.mxu0 0.0
        %454 = vmatpush1.msra.mxu0 0.0
        %455 = vmatprep.subr.mxu0 0.0
        %456 = vmatpush1.msra.mxu0 %v430
        %457 = vmatprep.subr.mxu0 0.0
        %458 = vmatpush1.msra.mxu0 %v429
        %459 = vmatprep.subr.mxu0 0.0
        %460 = vmatpush1.msra.mxu0 %v428
        %461 = vmatprep.subr.mxu0 0.0
        %462 = vmatpush1.msra.mxu0 %v427
        %463 = vmatprep.subr.mxu0 0.0
        %464 = vmatpush1.msra.mxu0 %v426
        %465 = vmatprep.subr.mxu0 0.0
        %466 = vmatpush1.msra.mxu0 %v425
        %467 = vmatprep.subr.mxu0 0.0
        %468 = vmatpush1.msra.mxu0 %v424
        %469 = vmatprep.subr.mxu0 0.0
        %470 = vmatpush1.msra.mxu0 %v423
        %471 = vmatprep.subr.mxu0 0.0
        %472 = vmatpush1.msra.mxu0 %v422
        %473 = vmatprep.subr.mxu0 0.0
        %474 = vmatpush2.msra.mxu0 0.0
        %475 = vmatprep.subr.mxu0 0.0
        %476 = vmatpush2.msra.mxu0 0.0
        %477 = vmatprep.subr.mxu0 0.0
        %478 = vmatpush2.msra.mxu0 0.0
        %479 = vmatprep.subr.mxu0 0.0
        %480 = vmatpush2.msra.mxu0 0.0
        %481 = vmatprep.subr.mxu0 0.0
        %482 = vmatpush2.msra.mxu0 0.0
        %483 = vmatprep.subr.mxu0 0.0
        %484 = vmatpush2.msra.mxu0 0.0
        %485 = vmatprep.subr.mxu0 0.0
        %486 = vmatpush2.msra.mxu0 0.0
        %487 = vmatprep.subr.mxu0 0.0
        %488 = vmatpush2.msra.mxu0 0.0
        %489 = vmatprep.subr.mxu0 0.0
        %490 = vmatpush2.msra.mxu0 0.0
        %491 = vmatprep.subr.mxu0 0.0
        %492 = vmatpush2.msra.mxu0 0.0
        %493 = vmatprep.subr.mxu0 0.0
        %494 = vmatpush2.msra.mxu0 0.0
        %495 = vmatprep.subr.mxu0 0.0
        %496 = vmatpush2.msra.mxu0 0.0
        %497 = vmatprep.subr.mxu0 0.0
        %498 = vmatpush2.msra.mxu0 0.0
        %499 = vmatprep.subr.mxu0 0.0
        %500 = vmatpush2.msra.mxu0 0.0
        %501 = vmatprep.subr.mxu0 0.0
        %502 = vmatpush2.msra.mxu0 0.0
        %503 = vmatprep.subr.mxu0 0.0
        %504 = vmatpush2.msra.mxu0 0.0
        %505 = vmatprep.mubr.f32.mxu0 0.0
        %506 = vmatmul.mubr.f32.gmra.mxu0 %v437
        %v507 = vpop.f32.mrf.mxu0
        %v508 = vadd.f32 0.0, %v507
        %v509 = vpop.f32.mrf.mxu0
        %510 = vmatprep.mubr.f32.mxu0 0.0
        %511 = vmatmul.mubr.f32.gmra.mxu0 %v439
        %v512 = vpop.f32.mrf.mxu0
        %v513 = vadd.f32 0.0, %v512
        %v514 = vpop.f32.mrf.mxu0
        %515 = vdwg.mxu0
        %v516 = vadd.f32 %v413, %v508
        %v517 = vadd.f32 %v418, %v513
        %v518 = vld [vmem:[%s2] sm:$0x1]
        %v520 = vlaneseq
        %v521 = vshrl.u32 %v520, 7
        %v522 = vsub.s32 0, %v521
        %v523 = vrot.slane %v518, %v522
        %v525 = vadd.f32 %v516, %v523
        %v526 = vadd.f32 %v517, %v523
        %v527 = vmax.f32 %v525, 0.0
        %v528 = vmax.f32 %v526, 0.0
        %v529 = vld [vmem:[%s230] sm:$0xff]
        %v530 = vld [vmem:[%s230 + $0x8] sm:$0xff]
        %v531 = vadd.f32 %v527, %v529
        %v532 = vadd.f32 %v528, %v530
        %533 = vst [vmem:[%s220] sm:$0xff] %v531
        %534 = vst [vmem:[%s220 + $0x8] sm:$0xff] %v532
        %s535 = sand.u32 %s121, 1
        %s536 = scalar_lea.sflag [#allocation4], %s535
        %s537 = sand.u32 %s121, 1
        %s538 = smul.addr %s537, 16
        %s539 = scalar_lea.vmem [#allocation5], %s538
        // Predicated region
        $region41: #{tpu_custom_call.1} parent=35 // pred_check
          %p540 = pneg %p131
        $region42: #{tpu_custom_call.1} parent=35 // pred_check_branch
          %542 = sbr.rel (%p540) target = $region44
        $region43: #{tpu_custom_call.1} parent=35 // pred_region
          %s544 = ssub.s32 256, 256
          %545 = vsyncadd %s536, %s544
          %s546 = smul.addr %s19, 2
          %s547 = smul.addr %s546, 128
          %s548 = scalar_lea.hbm %s4, %s547
          %s549 = sshll.u32 %s539, 4
          %s550 = int_to_ptr.vmem [resolvable:$true] %s549
          %555 = dma.vmem_to_hbm [thread:$0]  %s550, 256, %s548, %s536, 128, 128, 8
        $region44: #{tpu_custom_call.1} parent=35 // pred_fallthru
          _
      $region36: #{tpu_custom_call.1} parent=5 // pred_fallthru
        _
      %p556 = scmp.le.s32.totalorder 2, %s14
      // Predicated region
      $region45: #{tpu_custom_call.1} parent=5 // pred_check
        %p557 = pneg %p556
      $region46: #{tpu_custom_call.1} parent=5 // pred_check_branch
        %559 = sbr.rel (%p557) target = $region48
      $region47: #{tpu_custom_call.1} parent=5 // pred_region
        %s560 = ssub.s32 %s14, 2
        // Predicated region
        $region49: #{tpu_custom_call.1} parent=47 // pred_check
          %p561 = pneg %p137
        $region50: #{tpu_custom_call.1} parent=47 // pred_check_branch
          %563 = sbr.rel (%p561) target = $region52
        $region51: #{tpu_custom_call.1} parent=47 // pred_region
          %s564 = sand.u32 %s122, 1
          %s565 = scalar_lea.sflag [#allocation4], %s564
          %s566 = sand.u32 %s122, 1
          %s567 = smul.addr %s566, 16
          %s568 = scalar_lea.vmem [#allocation5], %s567
          %569 = dma.done %s565, 256
        $region52: #{tpu_custom_call.1} parent=47 // pred_fallthru
          _
      $region48: #{tpu_custom_call.1} parent=5 // pred_fallthru
        _
    $region6: #{tpu_custom_call.1} parent=1 // loop_footer
      %s18 = sadd.s32 1, %s14
    $region7: #{tpu_custom_call.1} parent=1 // loop_footer_branch
      %13 = sbr.rel target = $region3
    $region8: #{tpu_custom_call.1} parent=1 // loop_exit
      _
    %570 = vsyncpa [#allocation3], 1
    %s571 = scalar_lea.sflag [#allocation3], 1
    %572 = vsyncpa %s571, 1
    %573 = vsyncpa [#allocation4], 1
    %s574 = scalar_lea.sflag [#allocation4], 1
    %575 = vsyncpa %s574, 1

</llo_original>
